<compile_context>
chip_gen: v7x
topology: tpu7x:2x2x1
jax: 0.10.0
libtpu: 0.0.40
codegen_flags: <defaults>
</compile_context>

<pallas_src>
import jax
import jax.numpy as jnp
from jax.experimental import pallas as pl
from jax.experimental.pallas import tpu as pltpu

_LOG2E = 1.4426950408889634  # log2(e)


def _linear_potential_kernel(loc_aug_ref, a_aug_ref, coeff_ref, out_ref):
    # Exponent (already in the log2 domain, scale folded in) as one small-K MXU matmul:
    #   (M, 8) @ (8, TN) -> (M, TN),  expo[j, i] = -log2(e) * ||x_i - a_j||^2 / (2 w_j^2)
    expo = jnp.dot(a_aug_ref[...], loc_aug_ref[...],
                   preferred_element_type=jnp.float32)

    # Single EUP op per element; no VALU multiply (log2(e) folded in the wrapper).
    k = jnp.exp2(expo)                                           # (M, TN)

    # "@ anchor_coeffs": (1, M) @ (M, TN) -> (1, TN), full-contraction MXU matmul
    # with a lane-dense output block (unmasked vector stores).
    out_ref[...] = jnp.dot(coeff_ref[...], k, preferred_element_type=jnp.float32)


def _round_up(x, mult):
    return ((x + mult - 1) // mult) * mult


def linear_potential_forward(locations3d, anchor_locations3d, anchor_coeffs,
                             anchor_widths, *, max_tile_n=2048):
    """Pallas implementation of LinearPotential.forward (Gaussian-RBF operator)."""
    locations3d = jnp.asarray(locations3d, jnp.float32)          # (N, 3)
    anchors = jnp.asarray(anchor_locations3d, jnp.float32)       # (M, 3)
    coeffs = jnp.asarray(anchor_coeffs, jnp.float32)             # (M,)
    widths = jnp.asarray(anchor_widths, jnp.float32)             # (M,)

    n = locations3d.shape[0]
    m = anchors.shape[0]

    # Tile selection: large tiles amortize the ~0.35 us per-grid-step overhead, but
    # keep >= 2 tiles whenever N allows so both v7x TensorCores get "parallel" work.
    tile_n = min(max_tile_n, max(128, _round_up(pl.cdiv(n, 2), 128)))
    num_tiles = pl.cdiv(n, tile_n)
    padded_n = num_tiles * tile_n

    # Center coordinates: mitigates cancellation in the ||x||^2 - 2 a.x + ||a||^2
    # expansion used by the MXU exponent matmul.
    center = jnp.mean(anchors, axis=0, keepdims=True)            # (1, 3)
    loc_c = locations3d - center                                  # (N, 3)
    anc_c = anchors - center                                      # (M, 3)

    # scale2 = -log2(e) / (2 w^2): exp(-d2/(2 w^2)) == exp2(d2 * scale2).
    # (w == 0 anchors give -inf, matching the reference's divide-by-zero behavior.)
    scale2 = (-_LOG2E / (2.0 * widths * widths)).reshape(m, 1)    # (M, 1)

    # Augmented matrices so the whole per-pair exponent is one K=8 MXU matmul:
    #   A_aug columns: [-2*scale2*a (3), scale2 (1), scale2*||a||^2 (1), zeros (3)]
    #   L_aug rows   : [x, y, z, ||x||^2, 1, zeros (3)]
    a_aug = jnp.concatenate(
        [(-2.0 * scale2) * anc_c,                                 # (M, 3)
         scale2,                                                  # (M, 1)
         scale2 * jnp.sum(anc_c * anc_c, axis=1, keepdims=True),  # (M, 1)
         jnp.zeros((m, 3), jnp.float32)],                         # (M, 3) pad K -> 8
        axis=1)                                                   # (M, 8)

    loc_aug = jnp.concatenate(
        [loc_c.T,                                                 # (3, N)
         jnp.sum(loc_c * loc_c, axis=1)[None, :],                 # (1, N)
         jnp.ones((1, n), jnp.float32),                           # (1, N)
         jnp.zeros((3, n), jnp.float32)],                         # (3, N) pad K -> 8
        axis=0)                                                   # (8, N)
    if padded_n != n:
        loc_aug = jnp.pad(loc_aug, ((0, 0), (0, padded_n - n)))   # padded cols -> k=1, dropped

    coeffs_row = coeffs.reshape(1, m)

    out = pl.pallas_call(
        _linear_potential_kernel,
        out_shape=jax.ShapeDtypeStruct((1, padded_n), jnp.float32),
        grid_spec=pltpu.PrefetchScalarGridSpec(
            num_scalar_prefetch=0,
            grid=(num_tiles,),
            in_specs=[
                pl.BlockSpec((8, tile_n), lambda i: (0, i)),      # augmented points tile
                pl.BlockSpec((m, 8), lambda i: (0, 0)),           # augmented anchors (full)
                pl.BlockSpec((1, m), lambda i: (0, 0)),           # coeffs row (full)
            ],
            out_specs=pl.BlockSpec((1, tile_n), lambda i: (0, i)),
        ),
        compiler_params=pltpu.CompilerParams(
            dimension_semantics=("parallel",)),
        # TODO(synk): for very large M (>~1K anchors on v7x's 32 MiB scoped / 64 MiB
        # physical VMEM, ~2x that on v5e/v6e), add a trailing "arbitrary" anchor grid
        # axis with a (1, tile_n) f32 VMEM accumulator (pl.when init on first anchor
        # block / write-out on last) and set CompilerParams(vmem_limit_bytes=...).
    )(loc_aug, a_aug, coeffs_row)

    return out[0, :n]                                             # (N,)


def _reference_forward(locations3d, anchor_locations3d, anchor_coeffs, anchor_widths):
    d2 = jnp.sum(
        (locations3d[:, None, :] - anchor_locations3d[None, :, :]) ** 2, axis=-1)
    k = jnp.exp(-d2 / (2.0 * anchor_widths[None, :] ** 2))
    return k @ anchor_coeffs


if __name__ == "__main__":
    key = jax.random.PRNGKey(0)
    k1, k2, k3, k4 = jax.random.split(key, 4)

    N = 1000  # number of query points (not a multiple of 128 -> exercises padding; 2 tiles)
    M = 128   # number of anchors

    locations3d = jax.random.uniform(k1, (N, 3), jnp.float32, -1.0, 1.0)
    anchor_locations3d = jax.random.uniform(k2, (M, 3), jnp.float32, -1.0, 1.0)
    anchor_coeffs = jax.random.normal(k3, (M,), jnp.float32)
    anchor_widths = jax.random.uniform(k4, (M,), jnp.float32, 0.5, 1.5)

    out = linear_potential_forward(
        locations3d, anchor_locations3d, anchor_coeffs, anchor_widths)
    out = jax.block_until_ready(out)

    ref = _reference_forward(
        locations3d, anchor_locations3d, anchor_coeffs, anchor_widths)
    assert out.shape == (N,)
    assert jnp.allclose(out, ref, atol=1e-4, rtol=1e-4)

    print("KERNEL_OK")
</pallas_src>

<mosaic_0001>
module attributes {stable_mosaic.version = 11 : i64} {
  func.func @_linear_potential_kernel(%arg0: i32, %arg1: memref<8x512xf32, #tpu.memory_space<vmem>>, %arg2: memref<128x8xf32, #tpu.memory_space<vmem>>, %arg3: memref<1x128xf32, #tpu.memory_space<vmem>>, %arg4: memref<1x512xf32, #tpu.memory_space<vmem>>) attributes {dimension_semantics = [#tpu.dimension_semantics<parallel>], iteration_bounds = array<i64: 2>, scalar_prefetch = 0 : i64, scratch_operands = 0 : i64, tpu.core_type = #tpu.core_type<tc>, window_params = [{transform_indices = @transform_0, window_bounds = array<i64: 8, 512>}, {pipeline_mode = #tpu.pipeline_mode<synchronous>, transform_indices = @transform_1, window_bounds = array<i64: 128, 8>}, {pipeline_mode = #tpu.pipeline_mode<synchronous>, transform_indices = @transform_2, window_bounds = array<i64: 1, 128>}, {transform_indices = @transform_3, window_bounds = array<i64: 1, 512>}]} {
    %c0 = arith.constant 0 : index
    %c0_0 = arith.constant 0 : index
    %0 = vector.load %arg2[%c0, %c0_0] : memref<128x8xf32, #tpu.memory_space<vmem>>, vector<128x8xf32>
    %c0_1 = arith.constant 0 : index
    %c0_2 = arith.constant 0 : index
    %1 = vector.load %arg1[%c0_1, %c0_2] : memref<8x512xf32, #tpu.memory_space<vmem>>, vector<8x512xf32>
    %cst = arith.constant dense<0.000000e+00> : vector<128x512xf32>
    %2 = tpu.matmul %0, %1, %cst {dimension_numbers = #tpu.dot_dimension_numbers<[1], [0], [0], [1], [0, 0, 1, 1], [], []>} : vector<128x8xf32>, vector<8x512xf32>, vector<128x512xf32> -> vector<128x512xf32>
    %3 = math.exp2 %2 : vector<128x512xf32>
    %c0_3 = arith.constant 0 : index
    %c0_4 = arith.constant 0 : index
    %4 = vector.load %arg3[%c0_3, %c0_4] : memref<1x128xf32, #tpu.memory_space<vmem>>, vector<1x128xf32>
    %cst_5 = arith.constant dense<0.000000e+00> : vector<1x512xf32>
    %5 = tpu.matmul %4, %3, %cst_5 {dimension_numbers = #tpu.dot_dimension_numbers<[1], [0], [0], [1], [0, 0, 1, 1], [], []>} : vector<1x128xf32>, vector<128x512xf32>, vector<1x512xf32> -> vector<1x512xf32>
    %c0_6 = arith.constant 0 : index
    %c0_7 = arith.constant 0 : index
    %6 = vector.load %arg4[%c0_6, %c0_7] : memref<1x512xf32, #tpu.memory_space<vmem>>, vector<1x512xf32>
    tpu.vector_store %arg4[%c0_6, %c0_7], %5 {strides = array<i32>} : memref<1x512xf32, #tpu.memory_space<vmem>>, vector<1x512xf32>,
    return
  }
  func.func @transform_0(%arg0: i32) -> (i32, i32) {
    %c0_i32 = arith.constant 0 : i32
    %c0_i32_0 = arith.constant 0 : i32
    return %c0_i32, %arg0 : i32, i32
  }
  func.func @transform_1(%arg0: i32) -> (i32, i32) {
    %c0_i32 = arith.constant 0 : i32
    %c0_i32_0 = arith.constant 0 : i32
    %c0_i32_1 = arith.constant 0 : i32
    return %c0_i32, %c0_i32_0 : i32, i32
  }
  func.func @transform_2(%arg0: i32) -> (i32, i32) {
    %c0_i32 = arith.constant 0 : i32
    %c0_i32_0 = arith.constant 0 : i32
    %c0_i32_1 = arith.constant 0 : i32
    return %c0_i32, %c0_i32_0 : i32, i32
  }
  func.func @transform_3(%arg0: i32) -> (i32, i32) {
    %c0_i32 = arith.constant 0 : i32
    %c0_i32_0 = arith.constant 0 : i32
    return %c0_i32, %arg0 : i32, i32
  }
}

</mosaic_0001>

<llo_original>
// kernel: tpu_custom_call.1
$region0: #{tpu_custom_call.1}
  #allocation0 [shape = 'u32[]', space=smem, size = 0x4, offset = 0x4, fixed_abs, tag = 'smem constant byte address 0x4 - core index']
  #allocation1 [shape = 'u32[144,128]{1,0:T(1,128)}', space=vmem, size = 0x12000, scoped, tag = 'internal scratch']
  %s0 = inlined_call_operand.vmem [shape: f32[8,1024], index: 0, kind: input, shape index: {}]
  %s1 = inlined_call_operand.vmem [shape: f32[128,8], index: 1, kind: input, shape index: {}]
  %s2 = inlined_call_operand.vmem [shape: f32[1,128], index: 2, kind: input, shape index: {}]
  %s3 = inlined_call_operand.hbm [shape: f32[1,1024], index: 3, kind: output, shape index: {}]
  %s4 = sld [smem:[#allocation0]]
  $region45: #{tpu_custom_call.1} parent=0
    _
  %s6 = ssub.s32 1, %s4
  %s7 = scalar_select 0, %s6, %s4
  $region1: #{tpu_custom_call.1} parent=0
    #allocation2 [shape = 'u8[4096]{0}', space=vmem, size = 0x1000, scoped, tag = 'output window, operand 0']
    #allocation3 [shape = 's32[2]{0}', space=sflag, size = 0x8, scoped, tag = 'scoped memory for tpu_custom_call.1']
    %8 = vsyncpa [#allocation3], 0
    %s9 = scalar_lea.sflag [#allocation3], 1
    %10 = vsyncpa %s9, 0
    loop: start=0, step=1, limit=4
    $region2: #{tpu_custom_call.1} parent=1 // loop_pre_header
      _
    $region3: #{tpu_custom_call.1} parent=1 // loop_header
      %s12 = sphi 0, %s16
      %p13 = scmp.ge.s32.totalorder %s12, 4
      %s22 = sphi 0, %s24
      %s25 = sphi 0, %s22
      %s26 = sphi 0, %s25
      %s42 = sphi 0, %s26
      %s46 = sphi 0, %s46
      %s48 = sphi 0, %s46
      %s49 = sphi 0, %s48
      %s63 = sphi 0, %s49
      %s67 = sphi 0, %s67
      %s69 = sphi 0, %s67
      %s70 = sphi 0, %s69
      %s84 = sphi 0, %s70
      %s90 = sphi 0, %s92
      %s93 = sphi 0, %s90
      %s94 = sphi 0, %s93
      %s110 = sphi 0, %s94
    $region4: #{tpu_custom_call.1} parent=1 // loop_header_branch
      %15 = sbr.rel (%p13) target = $region8
    $region5: #{tpu_custom_call.1} parent=1 // loop_body
      %s17 = ssub.s32 %s12, 1
      %s18 = ssub.s32 %s12, 2
      %s19 = sadd.s32 %s12, 1
      %s20 = ssub.s32 %s12, %s19
      %p21 = scmp.eq.s32.totalorder %s20, 0
      %s23 = sadd.s32 %s22, 1
      %s24 = scalar_select %p21, %s22, %s23
      %p27 = pneg %p21
      %p28 = scmp.eq.s32.totalorder %s12, 1
      %p29 = por %p27, %p28
      %p30 = scmp.ne.s32.totalorder %s22, %s25
      %p31 = scmp.eq.s32.totalorder %s12, 0
      %p32 = por %p30, %p31
      %p33 = scmp.ne.s32.totalorder %s22, %s25
      %p34 = scmp.eq.s32.totalorder %s17, 1
      %p35 = por %p33, %p34
      %p36 = scmp.ne.s32.totalorder %s25, %s26
      %p37 = scmp.eq.s32.totalorder %s17, 0
      %p38 = por %p36, %p37
      %p39 = scmp.ne.s32.totalorder %s25, %s26
      %p40 = scmp.eq.s32.totalorder %s18, 1
      %p41 = por %p39, %p40
      %p43 = scmp.ne.s32.totalorder %s26, %s42
      %p44 = scmp.eq.s32.totalorder %s18, 0
      %p45 = por %p43, %p44
      %s47 = sadd.s32 %s46, 1
      %p50 = scmp.eq.s32.totalorder %s12, 1
      %p51 = scmp.ne.s32.totalorder %s46, %s48
      %p52 = scmp.eq.s32.totalorder %s12, 0
      %p53 = por %p51, %p52
      %p54 = scmp.ne.s32.totalorder %s46, %s48
      %p55 = scmp.eq.s32.totalorder %s17, 1
      %p56 = por %p54, %p55
      %p57 = scmp.ne.s32.totalorder %s48, %s49
      %p58 = scmp.eq.s32.totalorder %s17, 0
      %p59 = por %p57, %p58
      %p60 = scmp.ne.s32.totalorder %s48, %s49
      %p61 = scmp.eq.s32.totalorder %s18, 1
      %p62 = por %p60, %p61
      %p64 = scmp.ne.s32.totalorder %s49, %s63
      %p65 = scmp.eq.s32.totalorder %s18, 0
      %p66 = por %p64, %p65
      %s68 = sadd.s32 %s67, 1
      %p71 = scmp.eq.s32.totalorder %s12, 1
      %p72 = scmp.ne.s32.totalorder %s67, %s69
      %p73 = scmp.eq.s32.totalorder %s12, 0
      %p74 = por %p72, %p73
      %p75 = scmp.ne.s32.totalorder %s67, %s69
      %p76 = scmp.eq.s32.totalorder %s17, 1
      %p77 = por %p75, %p76
      %p78 = scmp.ne.s32.totalorder %s69, %s70
      %p79 = scmp.eq.s32.totalorder %s17, 0
      %p80 = por %p78, %p79
      %p81 = scmp.ne.s32.totalorder %s69, %s70
      %p82 = scmp.eq.s32.totalorder %s18, 1
      %p83 = por %p81, %p82
      %p85 = scmp.ne.s32.totalorder %s70, %s84
      %p86 = scmp.eq.s32.totalorder %s18, 0
      %p87 = por %p85, %p86
      %s88 = ssub.s32 %s12, %s19
      %p89 = scmp.eq.s32.totalorder %s88, 0
      %s91 = sadd.s32 %s90, 1
      %s92 = scalar_select %p89, %s90, %s91
      %p95 = pneg %p89
      %p96 = scmp.eq.s32.totalorder %s12, 1
      %p97 = por %p95, %p96
      %p98 = scmp.ne.s32.totalorder %s90, %s93
      %p99 = scmp.eq.s32.totalorder %s12, 0
      %p100 = por %p98, %p99
      %p101 = scmp.ne.s32.totalorder %s90, %s93
      %p102 = scmp.eq.s32.totalorder %s17, 1
      %p103 = por %p101, %p102
      %p104 = scmp.ne.s32.totalorder %s93, %s94
      %p105 = scmp.eq.s32.totalorder %s17, 0
      %p106 = por %p104, %p105
      %p107 = scmp.ne.s32.totalorder %s93, %s94
      %p108 = scmp.eq.s32.totalorder %s18, 1
      %p109 = por %p107, %p108
      %p111 = scmp.ne.s32.totalorder %s94, %s110
      %p112 = scmp.eq.s32.totalorder %s18, 0
      %p113 = por %p111, %p112
      %p114 = scmp.le.s32.totalorder 1, %s12
      %p115 = scmp.lt.s32.totalorder %s12, 3
      %p116 = pnand %p114, %p115
      %p117 = pneg %p116
      // Predicated region
      $region9: #{tpu_custom_call.1} parent=5 // pred_check
        _
      $region10: #{tpu_custom_call.1} parent=5 // pred_check_branch
        %119 = sbr.rel (%p116) target = $region12
      $region11: #{tpu_custom_call.1} parent=5 // pred_region
        %s120 = ssub.s32 %s12, 1
        // Predicated region
        $region13: #{tpu_custom_call.1} parent=11 // pred_check
          %p121 = pneg %p59
        $region14: #{tpu_custom_call.1} parent=11 // pred_check_branch
          %123 = sbr.rel (%p121) target = $region16
        $region15: #{tpu_custom_call.1} parent=11 // pred_region
          _
        $region16: #{tpu_custom_call.1} parent=11 // pred_fallthru
          _
        // Predicated region
        $region17: #{tpu_custom_call.1} parent=11 // pred_check
          %p124 = pneg %p80
        $region18: #{tpu_custom_call.1} parent=11 // pred_check_branch
          %126 = sbr.rel (%p124) target = $region20
        $region19: #{tpu_custom_call.1} parent=11 // pred_region
          _
        $region20: #{tpu_custom_call.1} parent=11 // pred_fallthru
          _
      $region12: #{tpu_custom_call.1} parent=5 // pred_fallthru
        _
      %p127 = scmp.lt.s32.totalorder %s12, 2
      // Predicated region
      $region21: #{tpu_custom_call.1} parent=5 // pred_check
        %p128 = pneg %p127
      $region22: #{tpu_custom_call.1} parent=5 // pred_check_branch
        %130 = sbr.rel (%p128) target = $region24
      $region23: #{tpu_custom_call.1} parent=5 // pred_region
        // Predicated region
        $region25: #{tpu_custom_call.1} parent=23 // pred_check
          %p131 = pneg %p32
        $region26: #{tpu_custom_call.1} parent=23 // pred_check_branch
          %133 = sbr.rel (%p131) target = $region28
        $region27: #{tpu_custom_call.1} parent=23 // pred_region
          %s134 = smul.u32 4, %s12
          %p135 = scmp.lt.s32.totalorder %s134, 7
          %s136 = scalar_select %p135, %s134, 7
          %s137 = smul.addr %s136, 8
          %s138 = scalar_lea.vmem %s0, %s137
          %s139 = smul.u32 4, %s12
        $region28: #{tpu_custom_call.1} parent=23 // pred_fallthru
          _
      $region24: #{tpu_custom_call.1} parent=5 // pred_fallthru
        _
      %p140 = scmp.le.s32.totalorder 1, %s12
      %p141 = scmp.lt.s32.totalorder %s12, 3
      %p142 = pnand %p140, %p141
      %p143 = pneg %p142
      // Predicated region
      $region29: #{tpu_custom_call.1} parent=5 // pred_check
        _
      $region30: #{tpu_custom_call.1} parent=5 // pred_check_branch
        %145 = sbr.rel (%p142) target = $region32
      $region31: #{tpu_custom_call.1} parent=5 // pred_region
        %s146 = ssub.s32 %s12, 1
        %s147 = smul.u32 4, %s17
        %p148 = scmp.lt.s32.totalorder %s147, 7
        %s149 = scalar_select %p148, %s147, 7
        %s150 = smul.addr %s149, 8
        %s151 = scalar_lea.vmem %s0, %s150
        %p152 = pneg %p38
        %p153 = pneg %p35
        %p154 = pneg %p59
        %p155 = pneg %p56
        %p156 = pneg %p80
        %p157 = pneg %p77
        %p158 = pneg %p106
        %p159 = pneg %p103
        %s160 = sand.u32 %s93, 1
        %s161 = scalar_lea.sflag [#allocation3], %s160
        %s162 = sand.u32 %s93, 1
        %s163 = smul.addr %s162, 4
        %s164 = scalar_lea.vmem [#allocation2], %s163
        %s165 = smul.u32 4, %s17
        %p166 = scmp.lt.s32.totalorder %s165, 7
        %s167 = scalar_select %p166, %s165, 7
        %s168 = smul.addr %s167, 8
        %s169 = scalar_lea.vmem %s0, %s168
        %s170 = smul.u32 4, %s17
        %s171 = smul.u32 4, %s17
        %v172 = vld [vmem:[%s1] sm:$0xff]
        %v173 = vld [vmem:[%s1 + $0x8] sm:$0xff]
        %v174 = vld [vmem:[%s1 + $0x10] sm:$0xff]
        %v175 = vld [vmem:[%s1 + $0x18] sm:$0xff]
        %v176 = vld [vmem:[%s1 + $0x20] sm:$0xff]
        %v177 = vld [vmem:[%s1 + $0x28] sm:$0xff]
        %v178 = vld [vmem:[%s1 + $0x30] sm:$0xff]
        %v179 = vld [vmem:[%s1 + $0x38] sm:$0xff]
        %v180 = vld [vmem:[%s1 + $0x40] sm:$0xff]
        %v181 = vld [vmem:[%s1 + $0x48] sm:$0xff]
        %v182 = vld [vmem:[%s1 + $0x50] sm:$0xff]
        %v183 = vld [vmem:[%s1 + $0x58] sm:$0xff]
        %v184 = vld [vmem:[%s1 + $0x60] sm:$0xff]
        %v185 = vld [vmem:[%s1 + $0x68] sm:$0xff]
        %v186 = vld [vmem:[%s1 + $0x70] sm:$0xff]
        %v187 = vld [vmem:[%s1 + $0x78] sm:$0xff]
        %v188 = vld [vmem:[%s169] sm:$0xff]
        %v189 = vld [vmem:[%s169 + $0x8] sm:$0xff]
        %v190 = vld [vmem:[%s169 + $0x10] sm:$0xff]
        %v191 = vld [vmem:[%s169 + $0x18] sm:$0xff]
        %vm192 = vcmask 64512
        %v194 = vsel %vm192, %v172, 0
        %v197 = vsel %vm192, %v173, 0
        %v200 = vsel %vm192, %v174, 0
        %v203 = vsel %vm192, %v175, 0
        %v206 = vsel %vm192, %v176, 0
        %v209 = vsel %vm192, %v177, 0
        %v212 = vsel %vm192, %v178, 0
        %v215 = vsel %vm192, %v179, 0
        %v218 = vsel %vm192, %v180, 0
        %v221 = vsel %vm192, %v181, 0
        %v224 = vsel %vm192, %v182, 0
        %v227 = vsel %vm192, %v183, 0
        %v230 = vsel %vm192, %v184, 0
        %v233 = vsel %vm192, %v185, 0
        %v236 = vsel %vm192, %v186, 0
        %v239 = vsel %vm192, %v187, 0
        %241 = vmatprep.subr.mxu0 %v189
        %242 = vmatpush1.msra.mxu0 %v188
        %243 = vmatprep.subr.mxu0 0.0
        %244 = vmatpush1.msra.mxu0 0.0
        %245 = vmatprep.subr.mxu0 0.0
        %246 = vmatpush1.msra.mxu0 0.0
        %247 = vmatprep.subr.mxu0 0.0
        %248 = vmatpush1.msra.mxu0 0.0
        %249 = vmatprep.subr.mxu0 0.0
        %250 = vmatpush1.msra.mxu0 0.0
        %251 = vmatprep.subr.mxu0 0.0
        %252 = vmatpush1.msra.mxu0 0.0
        %253 = vmatprep.subr.mxu0 0.0
        %254 = vmatpush1.msra.mxu0 0.0
        %255 = vmatprep.subr.mxu0 0.0
        %256 = vmatpush1.msra.mxu0 0.0
        %257 = vmatprep.subr.mxu0 0.0
        %258 = vmatpush1.msra.mxu0 0.0
        %259 = vmatprep.subr.mxu0 0.0
        %260 = vmatpush1.msra.mxu0 0.0
        %261 = vmatprep.subr.mxu0 0.0
        %262 = vmatpush1.msra.mxu0 0.0
        %263 = vmatprep.subr.mxu0 0.0
        %264 = vmatpush1.msra.mxu0 0.0
        %265 = vmatprep.subr.mxu0 0.0
        %266 = vmatpush1.msra.mxu0 0.0
        %267 = vmatprep.subr.mxu0 0.0
        %268 = vmatpush1.msra.mxu0 0.0
        %269 = vmatprep.subr.mxu0 0.0
        %270 = vmatpush1.msra.mxu0 0.0
        %271 = vmatprep.subr.mxu0 0.0
        %272 = vmatpush1.msra.mxu0 0.0
        %273 = vmatprep.subr.mxu0 0.0
        %274 = vmatpush1.msra.mxu0 0.0
        %275 = vmatprep.subr.mxu0 0.0
        %276 = vmatpush1.msra.mxu0 0.0
        %277 = vmatprep.subr.mxu0 0.0
        %278 = vmatpush1.msra.mxu0 0.0
        %279 = vmatprep.subr.mxu0 0.0
        %280 = vmatpush1.msra.mxu0 0.0
        %281 = vmatprep.subr.mxu0 0.0
        %282 = vmatpush1.msra.mxu0 0.0
        %283 = vmatprep.subr.mxu0 0.0
        %284 = vmatpush1.msra.mxu0 0.0
        %285 = vmatprep.subr.mxu0 0.0
        %286 = vmatpush1.msra.mxu0 0.0
        %287 = vmatprep.subr.mxu0 0.0
        %288 = vmatpush1.msra.mxu0 0.0
        %289 = vmatprep.subr.mxu0 0.0
        %290 = vmatpush1.msra.mxu0 0.0
        %291 = vmatprep.subr.mxu0 0.0
        %292 = vmatpush1.msra.mxu0 0.0
        %293 = vmatprep.subr.mxu0 0.0
        %294 = vmatpush1.msra.mxu0 0.0
        %295 = vmatprep.subr.mxu0 0.0
        %296 = vmatpush1.msra.mxu0 0.0
        %297 = vmatprep.subr.mxu0 0.0
        %298 = vmatpush1.msra.mxu0 0.0
        %299 = vmatprep.subr.mxu0 0.0
        %300 = vmatpush1.msra.mxu0 0.0
        %301 = vmatprep.subr.mxu0 0.0
        %302 = vmatpush1.msra.mxu0 0.0
        %303 = vmatprep.subr.mxu0 0.0
        %304 = vmatpush1.msra.mxu0 0.0
        %305 = vmatprep.mubr.f32.mxu0 0.0
        %306 = vmatmul.mubr.f32.gmra.mrb[0].mxu0 %v194
        %v307 = vpop.f32.mrb[0].mxu0
        %v308 = vadd.f32 0.0, %v307
        %v309 = vpop.f32.mrb[0].mxu0
        %v310 = vadd.f32 0.0, %v309
        %311 = vmatprep.mubr.f32.mxu0 0.0
        %312 = vmatmul.mubr.f32.gmra.mrb[0].mxu0 %v197
        %v313 = vpop.f32.mrb[0].mxu0
        %v314 = vadd.f32 0.0, %v313
        %v315 = vpop.f32.mrb[0].mxu0
        %v316 = vadd.f32 0.0, %v315
        %317 = vmatprep.mubr.f32.mxu0 0.0
        %318 = vmatmul.mubr.f32.gmra.mrb[0].mxu0 %v200
        %v319 = vpop.f32.mrb[0].mxu0
        %v320 = vadd.f32 0.0, %v319
        %v321 = vpop.f32.mrb[0].mxu0
        %v322 = vadd.f32 0.0, %v321
        %323 = vmatprep.mubr.f32.mxu0 0.0
        %324 = vmatmul.mubr.f32.gmra.mrb[0].mxu0 %v203
        %v325 = vpop.f32.mrb[0].mxu0
        %v326 = vadd.f32 0.0, %v325
        %v327 = vpop.f32.mrb[0].mxu0
        %v328 = vadd.f32 0.0, %v327
        %329 = vmatprep.mubr.f32.mxu0 0.0
        %330 = vmatmul.mubr.f32.gmra.mrb[0].mxu0 %v206
        %v331 = vpop.f32.mrb[0].mxu0
        %v332 = vadd.f32 0.0, %v331
        %v333 = vpop.f32.mrb[0].mxu0
        %v334 = vadd.f32 0.0, %v333
        %335 = vmatprep.mubr.f32.mxu0 0.0
        %336 = vmatmul.mubr.f32.gmra.mrb[0].mxu0 %v209
        %v337 = vpop.f32.mrb[0].mxu0
        %v338 = vadd.f32 0.0, %v337
        %v339 = vpop.f32.mrb[0].mxu0
        %v340 = vadd.f32 0.0, %v339
        %341 = vmatprep.mubr.f32.mxu0 0.0
        %342 = vmatmul.mubr.f32.gmra.mrb[0].mxu0 %v212
        %v343 = vpop.f32.mrb[0].mxu0
        %v344 = vadd.f32 0.0, %v343
        %v345 = vpop.f32.mrb[0].mxu0
        %v346 = vadd.f32 0.0, %v345
        %347 = vmatprep.mubr.f32.mxu0 0.0
        %348 = vmatmul.mubr.f32.gmra.mrb[0].mxu0 %v215
        %v349 = vpop.f32.mrb[0].mxu0
        %v350 = vadd.f32 0.0, %v349
        %v351 = vpop.f32.mrb[0].mxu0
        %v352 = vadd.f32 0.0, %v351
        %353 = vmatprep.mubr.f32.mxu0 0.0
        %354 = vmatmul.mubr.f32.gmra.mrb[0].mxu0 %v218
        %v355 = vpop.f32.mrb[0].mxu0
        %v356 = vadd.f32 0.0, %v355
        %v357 = vpop.f32.mrb[0].mxu0
        %v358 = vadd.f32 0.0, %v357
        %359 = vmatprep.mubr.f32.mxu0 0.0
        %360 = vmatmul.mubr.f32.gmra.mrb[0].mxu0 %v221
        %v361 = vpop.f32.mrb[0].mxu0
        %v362 = vadd.f32 0.0, %v361
        %v363 = vpop.f32.mrb[0].mxu0
        %v364 = vadd.f32 0.0, %v363
        %365 = vmatprep.mubr.f32.mxu0 0.0
        %366 = vmatmul.mubr.f32.gmra.mrb[0].mxu0 %v224
        %v367 = vpop.f32.mrb[0].mxu0
        %v368 = vadd.f32 0.0, %v367
        %v369 = vpop.f32.mrb[0].mxu0
        %v370 = vadd.f32 0.0, %v369
        %371 = vmatprep.mubr.f32.mxu0 0.0
        %372 = vmatmul.mubr.f32.gmra.mrb[0].mxu0 %v227
        %v373 = vpop.f32.mrb[0].mxu0
        %v374 = vadd.f32 0.0, %v373
        %v375 = vpop.f32.mrb[0].mxu0
        %v376 = vadd.f32 0.0, %v375
        %377 = vmatprep.mubr.f32.mxu0 0.0
        %378 = vmatmul.mubr.f32.gmra.mrb[0].mxu0 %v230
        %v379 = vpop.f32.mrb[0].mxu0
        %v380 = vadd.f32 0.0, %v379
        %v381 = vpop.f32.mrb[0].mxu0
        %v382 = vadd.f32 0.0, %v381
        %383 = vmatprep.mubr.f32.mxu0 0.0
        %384 = vmatmul.mubr.f32.gmra.mrb[0].mxu0 %v233
        %v385 = vpop.f32.mrb[0].mxu0
        %v386 = vadd.f32 0.0, %v385
        %v387 = vpop.f32.mrb[0].mxu0
        %v388 = vadd.f32 0.0, %v387
        %389 = vmatprep.mubr.f32.mxu0 0.0
        %390 = vmatmul.mubr.f32.gmra.mrb[0].mxu0 %v236
        %v391 = vpop.f32.mrb[0].mxu0
        %v392 = vadd.f32 0.0, %v391
        %v393 = vpop.f32.mrb[0].mxu0
        %v394 = vadd.f32 0.0, %v393
        %395 = vmatprep.mubr.f32.mxu0 0.0
        %396 = vmatmul.mubr.f32.gmra.mrb[0].mxu0 %v239
        %v397 = vpop.f32.mrb[0].mxu0
        %v398 = vadd.f32 0.0, %v397
        %v399 = vpop.f32.mrb[0].mxu0
        %v400 = vadd.f32 0.0, %v399
        %401 = vdwg.mxu0
        %402 = vmatprep.subr.mxu0 %v191
        %403 = vmatpush1.msra.mxu0 %v190
        %404 = vmatprep.subr.mxu0 0.0
        %405 = vmatpush1.msra.mxu0 0.0
        %406 = vmatprep.subr.mxu0 0.0
        %407 = vmatpush1.msra.mxu0 0.0
        %408 = vmatprep.subr.mxu0 0.0
        %409 = vmatpush1.msra.mxu0 0.0
        %410 = vmatprep.subr.mxu0 0.0
        %411 = vmatpush1.msra.mxu0 0.0
        %412 = vmatprep.subr.mxu0 0.0
        %413 = vmatpush1.msra.mxu0 0.0
        %414 = vmatprep.subr.mxu0 0.0
        %415 = vmatpush1.msra.mxu0 0.0
        %416 = vmatprep.subr.mxu0 0.0
        %417 = vmatpush1.msra.mxu0 0.0
        %418 = vmatprep.subr.mxu0 0.0
        %419 = vmatpush1.msra.mxu0 0.0
        %420 = vmatprep.subr.mxu0 0.0
        %421 = vmatpush1.msra.mxu0 0.0
        %422 = vmatprep.subr.mxu0 0.0
        %423 = vmatpush1.msra.mxu0 0.0
        %424 = vmatprep.subr.mxu0 0.0
        %425 = vmatpush1.msra.mxu0 0.0
        %426 = vmatprep.subr.mxu0 0.0
        %427 = vmatpush1.msra.mxu0 0.0
        %428 = vmatprep.subr.mxu0 0.0
        %429 = vmatpush1.msra.mxu0 0.0
        %430 = vmatprep.subr.mxu0 0.0
        %431 = vmatpush1.msra.mxu0 0.0
        %432 = vmatprep.subr.mxu0 0.0
        %433 = vmatpush1.msra.mxu0 0.0
        %434 = vmatprep.subr.mxu0 0.0
        %435 = vmatpush1.msra.mxu0 0.0
        %436 = vmatprep.subr.mxu0 0.0
        %437 = vmatpush1.msra.mxu0 0.0
        %438 = vmatprep.subr.mxu0 0.0
        %439 = vmatpush1.msra.mxu0 0.0
        %440 = vmatprep.subr.mxu0 0.0
        %441 = vmatpush1.msra.mxu0 0.0
        %442 = vmatprep.subr.mxu0 0.0
        %443 = vmatpush1.msra.mxu0 0.0
        %444 = vmatprep.subr.mxu0 0.0
        %445 = vmatpush1.msra.mxu0 0.0
        %446 = vmatprep.subr.mxu0 0.0
        %447 = vmatpush1.msra.mxu0 0.0
        %448 = vmatprep.subr.mxu0 0.0
        %449 = vmatpush1.msra.mxu0 0.0
        %450 = vmatprep.subr.mxu0 0.0
        %451 = vmatpush1.msra.mxu0 0.0
        %452 = vmatprep.subr.mxu0 0.0
        %453 = vmatpush1.msra.mxu0 0.0
        %454 = vmatprep.subr.mxu0 0.0
        %455 = vmatpush1.msra.mxu0 0.0
        %456 = vmatprep.subr.mxu0 0.0
        %457 = vmatpush1.msra.mxu0 0.0
        %458 = vmatprep.subr.mxu0 0.0
        %459 = vmatpush1.msra.mxu0 0.0
        %460 = vmatprep.subr.mxu0 0.0
        %461 = vmatpush1.msra.mxu0 0.0
        %462 = vmatprep.subr.mxu0 0.0
        %463 = vmatpush1.msra.mxu0 0.0
        %464 = vmatprep.subr.mxu0 0.0
        %465 = vmatpush1.msra.mxu0 0.0
        %466 = vmatprep.mubr.f32.mxu0 0.0
        %467 = vmatmul.mubr.f32.gmra.mrb[0].mxu0 %v194
        %v468 = vpop.f32.mrb[0].mxu0
        %v469 = vadd.f32 0.0, %v468
        %v470 = vpop.f32.mrb[0].mxu0
        %v471 = vadd.f32 0.0, %v470
        %472 = vmatprep.mubr.f32.mxu0 0.0
        %473 = vmatmul.mubr.f32.gmra.mrb[0].mxu0 %v197
        %v474 = vpop.f32.mrb[0].mxu0
        %v475 = vadd.f32 0.0, %v474
        %v476 = vpop.f32.mrb[0].mxu0
        %v477 = vadd.f32 0.0, %v476
        %478 = vmatprep.mubr.f32.mxu0 0.0
        %479 = vmatmul.mubr.f32.gmra.mrb[0].mxu0 %v200
        %v480 = vpop.f32.mrb[0].mxu0
        %v481 = vadd.f32 0.0, %v480
        %v482 = vpop.f32.mrb[0].mxu0
        %v483 = vadd.f32 0.0, %v482
        %484 = vmatprep.mubr.f32.mxu0 0.0
        %485 = vmatmul.mubr.f32.gmra.mrb[0].mxu0 %v203
        %v486 = vpop.f32.mrb[0].mxu0
        %v487 = vadd.f32 0.0, %v486
        %v488 = vpop.f32.mrb[0].mxu0
        %v489 = vadd.f32 0.0, %v488
        %490 = vmatprep.mubr.f32.mxu0 0.0
        %491 = vmatmul.mubr.f32.gmra.mrb[0].mxu0 %v206
        %v492 = vpop.f32.mrb[0].mxu0
        %v493 = vadd.f32 0.0, %v492
        %v494 = vpop.f32.mrb[0].mxu0
        %v495 = vadd.f32 0.0, %v494
        %496 = vmatprep.mubr.f32.mxu0 0.0
        %497 = vmatmul.mubr.f32.gmra.mrb[0].mxu0 %v209
        %v498 = vpop.f32.mrb[0].mxu0
        %v499 = vadd.f32 0.0, %v498
        %v500 = vpop.f32.mrb[0].mxu0
        %v501 = vadd.f32 0.0, %v500
        %502 = vmatprep.mubr.f32.mxu0 0.0
        %503 = vmatmul.mubr.f32.gmra.mrb[0].mxu0 %v212
        %v504 = vpop.f32.mrb[0].mxu0
        %v505 = vadd.f32 0.0, %v504
        %v506 = vpop.f32.mrb[0].mxu0
        %v507 = vadd.f32 0.0, %v506
        %508 = vmatprep.mubr.f32.mxu0 0.0
        %509 = vmatmul.mubr.f32.gmra.mrb[0].mxu0 %v215
        %v510 = vpop.f32.mrb[0].mxu0
        %v511 = vadd.f32 0.0, %v510
        %v512 = vpop.f32.mrb[0].mxu0
        %v513 = vadd.f32 0.0, %v512
        %514 = vmatprep.mubr.f32.mxu0 0.0
        %515 = vmatmul.mubr.f32.gmra.mrb[0].mxu0 %v218
        %v516 = vpop.f32.mrb[0].mxu0
        %v517 = vadd.f32 0.0, %v516
        %v518 = vpop.f32.mrb[0].mxu0
        %v519 = vadd.f32 0.0, %v518
        %520 = vmatprep.mubr.f32.mxu0 0.0
        %521 = vmatmul.mubr.f32.gmra.mrb[0].mxu0 %v221
        %v522 = vpop.f32.mrb[0].mxu0
        %v523 = vadd.f32 0.0, %v522
        %v524 = vpop.f32.mrb[0].mxu0
        %v525 = vadd.f32 0.0, %v524
        %526 = vmatprep.mubr.f32.mxu0 0.0
        %527 = vmatmul.mubr.f32.gmra.mrb[0].mxu0 %v224
        %v528 = vpop.f32.mrb[0].mxu0
        %v529 = vadd.f32 0.0, %v528
        %v530 = vpop.f32.mrb[0].mxu0
        %v531 = vadd.f32 0.0, %v530
        %532 = vmatprep.mubr.f32.mxu0 0.0
        %533 = vmatmul.mubr.f32.gmra.mrb[0].mxu0 %v227
        %v534 = vpop.f32.mrb[0].mxu0
        %v535 = vadd.f32 0.0, %v534
        %v536 = vpop.f32.mrb[0].mxu0
        %v537 = vadd.f32 0.0, %v536
        %538 = vmatprep.mubr.f32.mxu0 0.0
        %539 = vmatmul.mubr.f32.gmra.mrb[0].mxu0 %v230
        %v540 = vpop.f32.mrb[0].mxu0
        %v541 = vadd.f32 0.0, %v540
        %v542 = vpop.f32.mrb[0].mxu0
        %v543 = vadd.f32 0.0, %v542
        %544 = vmatprep.mubr.f32.mxu0 0.0
        %545 = vmatmul.mubr.f32.gmra.mrb[0].mxu0 %v233
        %v546 = vpop.f32.mrb[0].mxu0
        %v547 = vadd.f32 0.0, %v546
        %v548 = vpop.f32.mrb[0].mxu0
        %v549 = vadd.f32 0.0, %v548
        %550 = vmatprep.mubr.f32.mxu0 0.0
        %551 = vmatmul.mubr.f32.gmra.mrb[0].mxu0 %v236
        %v552 = vpop.f32.mrb[0].mxu0
        %v553 = vadd.f32 0.0, %v552
        %v554 = vpop.f32.mrb[0].mxu0
        %v555 = vadd.f32 0.0, %v554
        %556 = vmatprep.mubr.f32.mxu0 0.0
        %557 = vmatmul.mubr.f32.gmra.mrb[0].mxu0 %v239
        %v558 = vpop.f32.mrb[0].mxu0
        %v559 = vadd.f32 0.0, %v558
        %v560 = vpop.f32.mrb[0].mxu0
        %v561 = vadd.f32 0.0, %v560
        %562 = vdwg.mxu0
        %v563 = vpow.pop %v308
        %v564 = vpow.pop %v310
        %v565 = vpow.pop %v469
        %v566 = vpow.pop %v471
        %v567 = vpow.pop %v314
        %v568 = vpow.pop %v316
        %v569 = vpow.pop %v475
        %v570 = vpow.pop %v477
        %v571 = vpow.pop %v320
        %v572 = vpow.pop %v322
        %v573 = vpow.pop %v481
        %v574 = vpow.pop %v483
        %v575 = vpow.pop %v326
        %v576 = vpow.pop %v328
        %v577 = vpow.pop %v487
        %v578 = vpow.pop %v489
        %v579 = vpow.pop %v332
        %v580 = vpow.pop %v334
        %v581 = vpow.pop %v493
        %v582 = vpow.pop %v495
        %v583 = vpow.pop %v338
        %v584 = vpow.pop %v340
        %v585 = vpow.pop %v499
        %v586 = vpow.pop %v501
        %v587 = vpow.pop %v344
        %v588 = vpow.pop %v346
        %v589 = vpow.pop %v505
        %v590 = vpow.pop %v507
        %v591 = vpow.pop %v350
        %v592 = vpow.pop %v352
        %v593 = vpow.pop %v511
        %v594 = vpow.pop %v513
        %v595 = vpow.pop %v356
        %v596 = vpow.pop %v358
        %v597 = vpow.pop %v517
        %v598 = vpow.pop %v519
        %v599 = vpow.pop %v362
        %v600 = vpow.pop %v364
        %v601 = vpow.pop %v523
        %v602 = vpow.pop %v525
        %v603 = vpow.pop %v368
        %v604 = vpow.pop %v370
        %v605 = vpow.pop %v529
        %v606 = vpow.pop %v531
        %v607 = vpow.pop %v374
        %v608 = vpow.pop %v376
        %v609 = vpow.pop %v535
        %v610 = vpow.pop %v537
        %v611 = vpow.pop %v380
        %v612 = vpow.pop %v382
        %v613 = vpow.pop %v541
        %v614 = vpow.pop %v543
        %v615 = vpow.pop %v386
        %v616 = vpow.pop %v388
        %v617 = vpow.pop %v547
        %v618 = vpow.pop %v549
        %v619 = vpow.pop %v392
        %v620 = vpow.pop %v394
        %v621 = vpow.pop %v553
        %v622 = vpow.pop %v555
        %v623 = vpow.pop %v398
        %v624 = vpow.pop %v400
        %v625 = vpow.pop %v559
        %v626 = vpow.pop %v561
        %v627 = vld [vmem:[%s2] sm:$0x1]
        %628 = vmatprep.subr.mxu0 %v564
        %629 = vmatpush1.msra.mxu0 %v563
        %630 = vmatprep.subr.mxu0 %v568
        %631 = vmatpush1.msra.mxu0 %v567
        %632 = vmatprep.subr.mxu0 %v572
        %633 = vmatpush1.msra.mxu0 %v571
        %634 = vmatprep.subr.mxu0 %v576
        %635 = vmatpush1.msra.mxu0 %v575
        %636 = vmatprep.subr.mxu0 %v580
        %637 = vmatpush1.msra.mxu0 %v579
        %638 = vmatprep.subr.mxu0 %v584
        %639 = vmatpush1.msra.mxu0 %v583
        %640 = vmatprep.subr.mxu0 %v588
        %641 = vmatpush1.msra.mxu0 %v587
        %642 = vmatprep.subr.mxu0 %v592
        %643 = vmatpush1.msra.mxu0 %v591
        %644 = vmatprep.subr.mxu0 %v596
        %645 = vmatpush1.msra.mxu0 %v595
        %646 = vmatprep.subr.mxu0 %v600
        %647 = vmatpush1.msra.mxu0 %v599
        %648 = vmatprep.subr.mxu0 %v604
        %649 = vmatpush1.msra.mxu0 %v603
        %650 = vmatprep.subr.mxu0 %v608
        %651 = vmatpush1.msra.mxu0 %v607
        %652 = vmatprep.subr.mxu0 %v612
        %653 = vmatpush1.msra.mxu0 %v611
        %654 = vmatprep.subr.mxu0 %v616
        %655 = vmatpush1.msra.mxu0 %v615
        %656 = vmatprep.subr.mxu0 %v620
        %657 = vmatpush1.msra.mxu0 %v619
        %658 = vmatprep.subr.mxu0 %v624
        %659 = vmatpush1.msra.mxu0 %v623
        %660 = vmatprep.subr.mxu0 0.0
        %661 = vmatpush1.msra.mxu0 0.0
        %662 = vmatprep.subr.mxu0 0.0
        %663 = vmatpush1.msra.mxu0 0.0
        %664 = vmatprep.subr.mxu0 0.0
        %665 = vmatpush1.msra.mxu0 0.0
        %666 = vmatprep.subr.mxu0 0.0
        %667 = vmatpush1.msra.mxu0 0.0
        %668 = vmatprep.subr.mxu0 0.0
        %669 = vmatpush1.msra.mxu0 0.0
        %670 = vmatprep.subr.mxu0 0.0
        %671 = vmatpush1.msra.mxu0 0.0
        %672 = vmatprep.subr.mxu0 0.0
        %673 = vmatpush1.msra.mxu0 0.0
        %674 = vmatprep.subr.mxu0 0.0
        %675 = vmatpush1.msra.mxu0 0.0
        %676 = vmatprep.subr.mxu0 0.0
        %677 = vmatpush1.msra.mxu0 0.0
        %678 = vmatprep.subr.mxu0 0.0
        %679 = vmatpush1.msra.mxu0 0.0
        %680 = vmatprep.subr.mxu0 0.0
        %681 = vmatpush1.msra.mxu0 0.0
        %682 = vmatprep.subr.mxu0 0.0
        %683 = vmatpush1.msra.mxu0 0.0
        %684 = vmatprep.subr.mxu0 0.0
        %685 = vmatpush1.msra.mxu0 0.0
        %686 = vmatprep.subr.mxu0 0.0
        %687 = vmatpush1.msra.mxu0 0.0
        %688 = vmatprep.subr.mxu0 0.0
        %689 = vmatpush1.msra.mxu0 0.0
        %690 = vmatprep.subr.mxu0 0.0
        %691 = vmatpush1.msra.mxu0 0.0
        %692 = vmatprep.mubr.f32.mxu0 0.0
        %693 = vmatmul.mubr.f32.gmra.mrb[0].mxu0 %v627
        %v694 = vpop.f32.mrb[0].mxu0
        %v695 = vadd.f32 0.0, %v694
        %v696 = vpop.f32.mrb[0].mxu0
        %v697 = vadd.f32 0.0, %v696
        %698 = vdwg.mxu0
        %699 = vmatprep.subr.mxu0 %v566
        %700 = vmatpush1.msra.mxu0 %v565
        %701 = vmatprep.subr.mxu0 %v570
        %702 = vmatpush1.msra.mxu0 %v569
        %703 = vmatprep.subr.mxu0 %v574
        %704 = vmatpush1.msra.mxu0 %v573
        %705 = vmatprep.subr.mxu0 %v578
        %706 = vmatpush1.msra.mxu0 %v577
        %707 = vmatprep.subr.mxu0 %v582
        %708 = vmatpush1.msra.mxu0 %v581
        %709 = vmatprep.subr.mxu0 %v586
        %710 = vmatpush1.msra.mxu0 %v585
        %711 = vmatprep.subr.mxu0 %v590
        %712 = vmatpush1.msra.mxu0 %v589
        %713 = vmatprep.subr.mxu0 %v594
        %714 = vmatpush1.msra.mxu0 %v593
        %715 = vmatprep.subr.mxu0 %v598
        %716 = vmatpush1.msra.mxu0 %v597
        %717 = vmatprep.subr.mxu0 %v602
        %718 = vmatpush1.msra.mxu0 %v601
        %719 = vmatprep.subr.mxu0 %v606
        %720 = vmatpush1.msra.mxu0 %v605
        %721 = vmatprep.subr.mxu0 %v610
        %722 = vmatpush1.msra.mxu0 %v609
        %723 = vmatprep.subr.mxu0 %v614
        %724 = vmatpush1.msra.mxu0 %v613
        %725 = vmatprep.subr.mxu0 %v618
        %726 = vmatpush1.msra.mxu0 %v617
        %727 = vmatprep.subr.mxu0 %v622
        %728 = vmatpush1.msra.mxu0 %v621
        %729 = vmatprep.subr.mxu0 %v626
        %730 = vmatpush1.msra.mxu0 %v625
        %731 = vmatprep.subr.mxu0 0.0
        %732 = vmatpush1.msra.mxu0 0.0
        %733 = vmatprep.subr.mxu0 0.0
        %734 = vmatpush1.msra.mxu0 0.0
        %735 = vmatprep.subr.mxu0 0.0
        %736 = vmatpush1.msra.mxu0 0.0
        %737 = vmatprep.subr.mxu0 0.0
        %738 = vmatpush1.msra.mxu0 0.0
        %739 = vmatprep.subr.mxu0 0.0
        %740 = vmatpush1.msra.mxu0 0.0
        %741 = vmatprep.subr.mxu0 0.0
        %742 = vmatpush1.msra.mxu0 0.0
        %743 = vmatprep.subr.mxu0 0.0
        %744 = vmatpush1.msra.mxu0 0.0
        %745 = vmatprep.subr.mxu0 0.0
        %746 = vmatpush1.msra.mxu0 0.0
        %747 = vmatprep.subr.mxu0 0.0
        %748 = vmatpush1.msra.mxu0 0.0
        %749 = vmatprep.subr.mxu0 0.0
        %750 = vmatpush1.msra.mxu0 0.0
        %751 = vmatprep.subr.mxu0 0.0
        %752 = vmatpush1.msra.mxu0 0.0
        %753 = vmatprep.subr.mxu0 0.0
        %754 = vmatpush1.msra.mxu0 0.0
        %755 = vmatprep.subr.mxu0 0.0
        %756 = vmatpush1.msra.mxu0 0.0
        %757 = vmatprep.subr.mxu0 0.0
        %758 = vmatpush1.msra.mxu0 0.0
        %759 = vmatprep.subr.mxu0 0.0
        %760 = vmatpush1.msra.mxu0 0.0
        %761 = vmatprep.subr.mxu0 0.0
        %762 = vmatpush1.msra.mxu0 0.0
        %763 = vmatprep.mubr.f32.mxu0 0.0
        %764 = vmatmul.mubr.f32.gmra.mrb[0].mxu0 %v627
        %v765 = vpop.f32.mrb[0].mxu0
        %v766 = vadd.f32 0.0, %v765
        %v767 = vpop.f32.mrb[0].mxu0
        %v768 = vadd.f32 0.0, %v767
        %769 = vdwg.mxu0
        %v774 = vcombine.low %v695, %v697
        %v775 = vcombine.low %v766, %v768
        %v777 = vunpack.c.l.s4 1966171168
        %v778 = vunpack.c.0.s8 %v777
        %v779 = vlaneseq
        %v780 = vshrl.u32 %v779, 7
        %v781 = vsub.s32 %v778, %v780
        %v782 = vrot.slane %v774, %v781
        %v784 = vunpack.c.l.s4 1966171168
        %v785 = vunpack.c.0.s8 %v784
        %v786 = vlaneseq
        %v787 = vshrl.u32 %v786, 7
        %v788 = vsub.s32 %v785, %v787
        %v789 = vrot.slane %v775, %v788
        %v790 = vcombine.low %v782, %v789
        %v792 = vunpack.c.l.s4 1966171168
        %v793 = vunpack.c.0.s8 %v792
        %v794 = vlaneseq
        %v795 = vshrl.u32 %v794, 7
        %v796 = vsub.s32 %v793, %v795
        %v797 = vrot.slane %v790, %v796
        %v799 = vlaneseq
        %vm800 = vcmp.ge.s32.totalorder %v799, 0
        %vm801 = vcmp.lt.s32.totalorder %v799, 512
        %vm802 = vmand %vm800, %vm801
        %803 = vst.msk [vmem:[%s164] sm:$0xf] %vm802, %v797
        %s804 = sand.u32 %s93, 1
        %s805 = scalar_lea.sflag [#allocation3], %s804
        %s806 = sand.u32 %s93, 1
        %s807 = smul.addr %s806, 4
        %s808 = scalar_lea.vmem [#allocation2], %s807
        // Predicated region
        $region33: #{tpu_custom_call.1} parent=31 // pred_check
          %p809 = pneg %p103
        $region34: #{tpu_custom_call.1} parent=31 // pred_check_branch
          %811 = sbr.rel (%p809) target = $region36
        $region35: #{tpu_custom_call.1} parent=31 // pred_region
          %s812 = smul.u32 4, %s17
          %s814 = ssub.s32 64, 64
          %815 = vsyncadd %s805, %s814
          %s816 = smul.addr %s812, 16
          %s817 = scalar_lea.hbm %s3, %s816
          %s819 = sshll.u32 %s808, 4
          %s820 = int_to_ptr.vmem [resolvable:$true] %s819
          %822 = dma.vmem_to_hbm [thread:$0]  %s820, 64, %s817, %s805
        $region36: #{tpu_custom_call.1} parent=31 // pred_fallthru
          _
      $region32: #{tpu_custom_call.1} parent=5 // pred_fallthru
        _
      %p823 = scmp.le.s32.totalorder 2, %s12
      // Predicated region
      $region37: #{tpu_custom_call.1} parent=5 // pred_check
        %p824 = pneg %p823
      $region38: #{tpu_custom_call.1} parent=5 // pred_check_branch
        %826 = sbr.rel (%p824) target = $region40
      $region39: #{tpu_custom_call.1} parent=5 // pred_region
        %s827 = ssub.s32 %s12, 2
        // Predicated region
        $region41: #{tpu_custom_call.1} parent=39 // pred_check
          %p828 = pneg %p109
        $region42: #{tpu_custom_call.1} parent=39 // pred_check_branch
          %830 = sbr.rel (%p828) target = $region44
        $region43: #{tpu_custom_call.1} parent=39 // pred_region
          %s831 = sand.u32 %s94, 1
          %s832 = scalar_lea.sflag [#allocation3], %s831
          %s833 = sand.u32 %s94, 1
          %s834 = smul.addr %s833, 4
          %s835 = scalar_lea.vmem [#allocation2], %s834
          %836 = dma.done %s832, 64
        $region44: #{tpu_custom_call.1} parent=39 // pred_fallthru
          _
      $region40: #{tpu_custom_call.1} parent=5 // pred_fallthru
        _
    $region6: #{tpu_custom_call.1} parent=1 // loop_footer
      %s16 = sadd.s32 1, %s12
    $region7: #{tpu_custom_call.1} parent=1 // loop_footer_branch
      %11 = sbr.rel target = $region3
    $region8: #{tpu_custom_call.1} parent=1 // loop_exit
      _
    %837 = vsyncpa [#allocation3], 1
    %s838 = scalar_lea.sflag [#allocation3], 1
    %839 = vsyncpa %s838, 1

</llo_original>
